<compile_context>
chip_gen: v5e
topology: v5e:2x2
jax: 0.10.0
libtpu: 0.0.40
codegen_flags: <defaults>
</compile_context>

<pallas_src>
import math

import jax
import jax.numpy as jnp
from jax import lax
from jax.experimental import pallas as pl
from jax.experimental.pallas import tpu as pltpu

LANES = 128            # vreg lane width
SUBLANES = 8           # f32 vreg sublane count (accumulator height)
GROUP_ROWS = 64        # rows reduced per inner-loop step (multiple of 8/16/32 packing)
TARGET_TILE_BYTES = 2 * 1024 * 1024   # HBM bytes per input per pipeline buffer per step


def _round_up(x: int, m: int) -> int:
    return ((x + m - 1) // m) * m


def _num_tensorcores() -> int:
    """Best-effort TensorCores-per-device (2 only on dual-TC / megacore parts)."""
    try:
        kind = jax.devices()[0].device_kind.lower()
    except Exception:
        return 1
    return 2 if any(tag in kind for tag in ("v7", "v4", "v5p")) else 1


def _make_mse_kernel(rows: int, tile_rows: int, blocks_per_split: int,
                     full_blocks: int, needs_mask: bool):
    num_groups = tile_rows // GROUP_ROWS
    unroll = math.gcd(num_groups, 8)      # divisor of the trip count, <= 8

    def _partial_sum(r_ref, t_ref, blk, masked: bool):
        # Fold the (tile_rows, 128) tile into a single (8, 128) f32 vreg of partial
        # sums, GROUP_ROWS rows at a time.  Inputs stay in native dtype in VMEM; the
        # f32 cast happens per group on the VPU path.
        def body(g, acc):
            start = pl.multiple_of(g * GROUP_ROWS, GROUP_ROWS)
            rs = r_ref[pl.ds(start, GROUP_ROWS), :].astype(jnp.float32)
            ts = t_ref[pl.ds(start, GROUP_ROWS), :].astype(jnp.float32)
            d = rs - ts
            sq = d * d
            if masked:
                row_ids = (blk * tile_rows + start
                           + lax.broadcasted_iota(jnp.int32, (GROUP_ROWS, LANES), 0))
                sq = jnp.where(row_ids < rows, sq, 0.0)
            # Pure vreg adds (no XLU) -- grouping matches native (8,128) f32 tiles.
            return acc + sq.reshape(GROUP_ROWS // SUBLANES, SUBLANES, LANES).sum(axis=0)

        return lax.fori_loop(0, num_groups, body,
                             jnp.zeros((SUBLANES, LANES), jnp.float32),
                             unroll=unroll)

    def kernel(r_ref, t_ref, o_ref):
        c = pl.program_id(0)   # split index ("parallel": shards across TCs on dual-TC chips)
        i = pl.program_id(1)   # streaming/reduction step within the split ("arbitrary")

        @pl.when(i == 0)
        def _():
            o_ref[...] = jnp.zeros_like(o_ref)

        if needs_mask:
            blk = c * blocks_per_split + i

            # Interior (fully valid) blocks: unmasked accumulate -- no iota/select work.
            @pl.when(blk < full_blocks)
            def _():
                o_ref[...] += _partial_sum(r_ref, t_ref, blk, masked=False)

            # Edge block(s): partial last block and/or clamped "dummy" blocks of the
            # last split; garbage/OOB rows are zeroed by the select before accumulation.
            @pl.when(blk >= full_blocks)
            def _():
                o_ref[...] += _partial_sum(r_ref, t_ref, blk, masked=True)
        else:
            o_ref[...] += _partial_sum(r_ref, t_ref, None, masked=False)

    return kernel


def centroid_loss(result: jax.Array, target: jax.Array) -> jax.Array:
    """Equivalent of F.mse_loss(result, target, reduction='mean'). Returns f32 scalar."""
    assert result.shape == target.shape, "result/target shape mismatch"
    n = result.size
    if n == 0:
        return jnp.float32(float("nan"))   # torch mean over empty -> NaN

    r_flat = result.reshape(-1)
    t_flat = target.reshape(-1)

    rem = n % LANES
    n_main = n - rem
    rows = n_main // LANES

    tail_sum = None
    if rem:
        # <128-element tail: tiny plain-JAX sum (no full-tensor pad/copy).
        r_tail = r_flat[n_main:].astype(jnp.float32)
        t_tail = t_flat[n_main:].astype(jnp.float32)
        tail_sum = jnp.sum((r_tail - t_tail) ** 2)

    if rows == 0:                              # whole input fits in the tail
        return tail_sum / jnp.float32(n)

    # Aligned path (rem == 0) is a pure reshape (free).  On the rare misaligned path
    # XLA may materialize the prefix slice; still far cheaper than the old pad path
    # for anything but pathological shapes.
    r2 = (r_flat[:n_main] if rem else r_flat).reshape(rows, LANES)
    t2 = (t_flat[:n_main] if rem else t_flat).reshape(rows, LANES)

    # Dtype-scaled tile: keep per-step HBM bytes ~constant; always a multiple of 64
    # rows so packed-sublane (16,128)/(32,128) constraints hold and the group loop
    # covers the tile exactly.
    itemsize = max(jnp.dtype(result.dtype).itemsize, jnp.dtype(target.dtype).itemsize)
    rows_cap = max(GROUP_ROWS,
                   (TARGET_TILE_BYTES // (LANES * itemsize)) // GROUP_ROWS * GROUP_ROWS)
    tile_rows = min(rows_cap, _round_up(rows, GROUP_ROWS))

    num_blocks = pl.cdiv(rows, tile_rows)
    num_splits = 2 if (_num_tensorcores() >= 2 and num_blocks >= 2) else 1
    blocks_per_split = pl.cdiv(num_blocks, num_splits)
    full_blocks = rows // tile_rows            # blocks strictly below this are fully valid
    needs_mask = (num_splits * blocks_per_split * tile_rows) != rows

    def in_map(c, i):
        # Clamp so trailing dummy blocks of the last split still issue an in-bounds
        # DMA; their contribution is zeroed by the in-kernel row mask.
        return (jnp.minimum(c * blocks_per_split + i, num_blocks - 1), 0)

    cost = pl.CostEstimate(
        flops=3 * rows * LANES,
        transcendentals=0,
        bytes_accessed=rows * LANES * (jnp.dtype(result.dtype).itemsize
                                       + jnp.dtype(target.dtype).itemsize)
                       + num_splits * SUBLANES * LANES * 4,
    )

    partials = pl.pallas_call(
        _make_mse_kernel(rows, tile_rows, blocks_per_split, full_blocks, needs_mask),
        out_shape=jax.ShapeDtypeStruct((num_splits * SUBLANES, LANES), jnp.float32),
        grid_spec=pltpu.PrefetchScalarGridSpec(
            num_scalar_prefetch=0,
            grid=(num_splits, blocks_per_split),
            in_specs=[
                pl.BlockSpec((tile_rows, LANES), in_map),
                pl.BlockSpec((tile_rows, LANES), in_map),
            ],
            out_specs=pl.BlockSpec((SUBLANES, LANES), lambda c, i: (c, 0)),
        ),
        compiler_params=pltpu.CompilerParams(
            dimension_semantics=("parallel", "arbitrary")),
        cost_estimate=cost,
    )(r2, t2)

    total = jnp.sum(partials)
    if rem:
        total = total + tail_sum
    return total / jnp.float32(n)


if __name__ == "__main__":
    key = jax.random.PRNGKey(0)

    def check(shape, subkey, dtype=jnp.float32, atol=1e-6):
        k1, k2 = jax.random.split(subkey)
        result = jax.random.normal(k1, shape, dtype=jnp.float32).astype(dtype)
        target = jax.random.normal(k2, shape, dtype=jnp.float32).astype(dtype)
        loss = jax.block_until_ready(centroid_loss(result, target))
        ref = jnp.mean((result.astype(jnp.float32) - target.astype(jnp.float32)) ** 2)
        assert jnp.allclose(loss, ref, rtol=1e-4, atol=atol), (shape, dtype, loss, ref)

    # Primary NCHW shape consistent with CentroidLoss.forward(result, target).
    check((2, 4, 16, 16), jax.random.fold_in(key, 0))
    # numel not a multiple of 128: plain-JAX tail path (no full-tensor pad).
    check((2, 3, 13, 7), jax.random.fold_in(key, 1))
    # Single full block, unmasked path.
    check((2, 4, 128, 128), jax.random.fold_in(key, 2))
    # Partial last block (masked edge path, 1025 rows vs 1088-row tile).
    check((5, 4, 82, 80), jax.random.fold_in(key, 3))
    # Multiple full-size streaming blocks (steady-state accumulation across the grid).
    check((8, 4, 128, 256), jax.random.fold_in(key, 4))
    # bf16 inputs: dtype-scaled tile rows, in-kernel f32 cast.
    check((2, 4, 64, 64), jax.random.fold_in(key, 5), dtype=jnp.bfloat16, atol=1e-2)

    print("KERNEL_OK")
</pallas_src>

<mosaic_0001>
module attributes {stable_mosaic.version = 11 : i64} {
  func.func @kernel(%arg0: i32, %arg1: i32, %arg2: memref<64x128xf32, #tpu.memory_space<vmem>>, %arg3: memref<64x128xf32, #tpu.memory_space<vmem>>, %arg4: memref<8x128xf32, #tpu.memory_space<vmem>>) attributes {dimension_semantics = [#tpu.dimension_semantics<parallel>, #tpu.dimension_semantics<arbitrary>], iteration_bounds = array<i64: 1, 1>, scalar_prefetch = 0 : i64, scratch_operands = 0 : i64, tpu.core_type = #tpu.core_type<tc>, window_params = [{transform_indices = @transform_0, window_bounds = array<i64: 64, 128>}, {transform_indices = @transform_1, window_bounds = array<i64: 64, 128>}, {transform_indices = @transform_2, window_bounds = array<i64: 8, 128>}]} {
    %c0_i32 = arith.constant 0 : i32
    %0 = arith.cmpi eq, %arg1, %c0_i32 : i32
    %1 = arith.extui %0 : i1 to i32
    %c0_i32_0 = arith.constant 0 : i32
    %2 = arith.cmpi ne, %1, %c0_i32_0 : i32
    scf.if %2 {
      %cst = arith.constant 0.000000e+00 : f32
      %11 = vector.broadcast %cst : f32 to vector<8x128xf32>
      %c0 = arith.constant 0 : index
      %c0_5 = arith.constant 0 : index
      %12 = vector.load %arg4[%c0, %c0_5] : memref<8x128xf32, #tpu.memory_space<vmem>>, vector<8x128xf32>
      tpu.vector_store %arg4[%c0, %c0_5], %11 {strides = array<i32>} : memref<8x128xf32, #tpu.memory_space<vmem>>, vector<8x128xf32>,
    } else {
    }
    %c1_i32 = arith.constant 1 : i32
    %3 = arith.muli %arg0, %c1_i32 : i32
    %4 = arith.addi %3, %arg1 : i32
    %c0_i32_1 = arith.constant 0 : i32
    %5 = arith.cmpi slt, %4, %c0_i32_1 : i32
    %6 = arith.extui %5 : i1 to i32
    %c0_i32_2 = arith.constant 0 : i32
    %7 = arith.cmpi ne, %6, %c0_i32_2 : i32
    scf.if %7 {
      %c0 = arith.constant 0 : index
      %c0_5 = arith.constant 0 : index
      %11 = vector.load %arg4[%c0, %c0_5] : memref<8x128xf32, #tpu.memory_space<vmem>>, vector<8x128xf32>
      %cst = arith.constant 0.000000e+00 : f32
      %12 = vector.broadcast %cst : f32 to vector<8x128xf32>
      %c0_i32_6 = arith.constant 0 : i32
      %c64_i32 = arith.constant 64 : i32
      %13 = arith.muli %c0_i32_6, %c64_i32 : i32
      %14 = tpu.assume_multiple %13, 64 : i32
      %15 = arith.index_cast %14 : i32 to index
      %c0_7 = arith.constant 0 : index
      %16 = vector.load %arg2[%15, %c0_7] : memref<64x128xf32, #tpu.memory_space<vmem>>, vector<64x128xf32>
      %17 = arith.index_cast %14 : i32 to index
      %c0_8 = arith.constant 0 : index
      %18 = vector.load %arg3[%17, %c0_8] : memref<64x128xf32, #tpu.memory_space<vmem>>, vector<64x128xf32>
      %19 = arith.subf %16, %18 : vector<64x128xf32>
      %20 = arith.mulf %19, %19 : vector<64x128xf32>
      %21 = vector.shape_cast %20 : vector<64x128xf32> to vector<8x8x128xf32>
      %cst_9 = arith.constant dense<0.000000e+00> : vector<8x128xf32>
      %22 = vector.multi_reduction <add>, %21, %cst_9 [0] : vector<8x8x128xf32> to vector<8x128xf32>
      %23 = arith.addf %12, %22 : vector<8x128xf32>
      %c1_i32_10 = arith.constant 1 : i32
      %24 = arith.addf %11, %23 : vector<8x128xf32>
      %c0_11 = arith.constant 0 : index
      %c0_12 = arith.constant 0 : index
      %25 = vector.load %arg4[%c0_11, %c0_12] : memref<8x128xf32, #tpu.memory_space<vmem>>, vector<8x128xf32>
      tpu.vector_store %arg4[%c0_11, %c0_12], %24 {strides = array<i32>} : memref<8x128xf32, #tpu.memory_space<vmem>>, vector<8x128xf32>,
    } else {
    }
    %c0_i32_3 = arith.constant 0 : i32
    %8 = arith.cmpi sge, %4, %c0_i32_3 : i32
    %9 = arith.extui %8 : i1 to i32
    %c0_i32_4 = arith.constant 0 : i32
    %10 = arith.cmpi ne, %9, %c0_i32_4 : i32
    scf.if %10 {
      %c0 = arith.constant 0 : index
      %c0_5 = arith.constant 0 : index
      %11 = vector.load %arg4[%c0, %c0_5] : memref<8x128xf32, #tpu.memory_space<vmem>>, vector<8x128xf32>
      %cst = arith.constant 0.000000e+00 : f32
      %12 = vector.broadcast %cst : f32 to vector<8x128xf32>
      %c0_i32_6 = arith.constant 0 : i32
      %c64_i32 = arith.constant 64 : i32
      %13 = arith.muli %c0_i32_6, %c64_i32 : i32
      %14 = tpu.assume_multiple %13, 64 : i32
      %15 = arith.index_cast %14 : i32 to index
      %c0_7 = arith.constant 0 : index
      %16 = vector.load %arg2[%15, %c0_7] : memref<64x128xf32, #tpu.memory_space<vmem>>, vector<64x128xf32>
      %17 = arith.index_cast %14 : i32 to index
      %c0_8 = arith.constant 0 : index
      %18 = vector.load %arg3[%17, %c0_8] : memref<64x128xf32, #tpu.memory_space<vmem>>, vector<64x128xf32>
      %19 = arith.subf %16, %18 : vector<64x128xf32>
      %20 = arith.mulf %19, %19 : vector<64x128xf32>
      %c64_i32_9 = arith.constant 64 : i32
      %21 = arith.muli %4, %c64_i32_9 : i32
      %22 = arith.addi %21, %14 : i32
      %23 = tpu.iota {dimensions = array<i32: 0>} : vector<64x128xi32>
      %24 = vector.broadcast %22 : i32 to vector<64x128xi32>
      %25 = arith.addi %24, %23 : vector<64x128xi32>
      %c16_i32 = arith.constant 16 : i32
      %26 = vector.broadcast %c16_i32 : i32 to vector<64x128xi32>
      %27 = arith.cmpi slt, %25, %26 : vector<64x128xi32>
      %cst_10 = arith.constant 0.000000e+00 : f32
      %28 = vector.broadcast %cst_10 : f32 to vector<64x128xf32>
      %29 = arith.select %27, %20, %28 : vector<64x128xi1>, vector<64x128xf32>
      %30 = vector.shape_cast %29 : vector<64x128xf32> to vector<8x8x128xf32>
      %cst_11 = arith.constant dense<0.000000e+00> : vector<8x128xf32>
      %31 = vector.multi_reduction <add>, %30, %cst_11 [0] : vector<8x8x128xf32> to vector<8x128xf32>
      %32 = arith.addf %12, %31 : vector<8x128xf32>
      %c1_i32_12 = arith.constant 1 : i32
      %33 = arith.addf %11, %32 : vector<8x128xf32>
      %c0_13 = arith.constant 0 : index
      %c0_14 = arith.constant 0 : index
      %34 = vector.load %arg4[%c0_13, %c0_14] : memref<8x128xf32, #tpu.memory_space<vmem>>, vector<8x128xf32>
      tpu.vector_store %arg4[%c0_13, %c0_14], %33 {strides = array<i32>} : memref<8x128xf32, #tpu.memory_space<vmem>>, vector<8x128xf32>,
    } else {
    }
    return
  }
  func.func @transform_0(%arg0: i32, %arg1: i32) -> (i32, i32) {
    %c1_i32 = arith.constant 1 : i32
    %0 = arith.muli %arg0, %c1_i32 : i32
    %1 = arith.addi %0, %arg1 : i32
    %c0_i32 = arith.constant 0 : i32
    %2 = arith.minsi %1, %c0_i32 : i32
    %c0_i32_0 = arith.constant 0 : i32
    %c0_i32_1 = arith.constant 0 : i32
    return %2, %c0_i32_0 : i32, i32
  }
  func.func @transform_1(%arg0: i32, %arg1: i32) -> (i32, i32) {
    %c1_i32 = arith.constant 1 : i32
    %0 = arith.muli %arg0, %c1_i32 : i32
    %1 = arith.addi %0, %arg1 : i32
    %c0_i32 = arith.constant 0 : i32
    %2 = arith.minsi %1, %c0_i32 : i32
    %c0_i32_0 = arith.constant 0 : i32
    %c0_i32_1 = arith.constant 0 : i32
    return %2, %c0_i32_0 : i32, i32
  }
  func.func @transform_2(%arg0: i32, %arg1: i32) -> (i32, i32) {
    %c0_i32 = arith.constant 0 : i32
    %c0_i32_0 = arith.constant 0 : i32
    return %arg0, %c0_i32 : i32, i32
  }
}

</mosaic_0001>

<llo_original>
// kernel: tpu_custom_call.1
$region0: #{tpu_custom_call.1}
  #allocation0 [shape = 'u32[]', space=smem, size = 0x4, offset = 0x4, fixed_abs, tag = 'smem constant byte address 0x4 - core index']
  #allocation1 [shape = 'u32[72,128]{1,0:T(1,128)}', space=vmem, size = 0x9000, scoped, tag = 'internal scratch']
  %s0 = inlined_call_operand.hbm [shape: f32[16,128], index: 0, kind: input, shape index: {}]
  %s1 = inlined_call_operand.hbm [shape: f32[16,128], index: 1, kind: input, shape index: {}]
  %s2 = inlined_call_operand.hbm [shape: f32[8,128], index: 2, kind: output, shape index: {}]
  %s3 = sld [smem:[#allocation0]]
  $region38: #{tpu_custom_call.1} parent=0
    _
  %s5 = ssub.s32 1, %s3
  %s6 = scalar_select 0, %s5, %s3
  $region1: #{tpu_custom_call.1} parent=0
    #allocation2 [shape = 'u8[32768]{0}', space=vmem, size = 0x8000, scoped, tag = 'input window, operand 0, single buffered']
    #allocation3 [shape = 's32[1]{0}', space=sflag, size = 0x4, scoped, tag = 'scoped memory for tpu_custom_call.1']
    #allocation4 [shape = 's32[1]{0}', space=sflag, size = 0x4, scoped, tag = 'scoped memory for tpu_custom_call.1']
    #allocation5 [shape = 'u8[32768]{0}', space=vmem, size = 0x8000, scoped, tag = 'input window, operand 1, single buffered']
    #allocation6 [shape = 's32[1]{0}', space=sflag, size = 0x4, scoped, tag = 'scoped memory for tpu_custom_call.1']
    #allocation7 [shape = 'u8[4096]{0}', space=vmem, size = 0x1000, scoped, tag = 'output window, operand 0, single buffered']
    %7 = vsyncpa [#allocation3], 0
    %8 = vsyncpa [#allocation6], 0
    %9 = vsyncpa [#allocation4], 0
    // Predicated region
    $region2: #{tpu_custom_call.1} parent=1 // pred_check
      _
    $region3: #{tpu_custom_call.1} parent=1 // pred_check_branch
      %11 = sbr.rel (0) target = $region5
    $region4: #{tpu_custom_call.1} parent=1 // pred_region
      %s12 = sadd.s32 0, 0
      %p13 = scmp.lt.s32.totalorder %s12, 0
      %s14 = scalar_select %p13, %s12, 0
      %s15 = smul.u32 8, %s14
      %s16 = ssub.s32 2, %s15
      %s17 = smul.u32 8, %s16
      %s18 = ssub.s32 64, %s17
      %s19 = sshll.u32 %s18, 4
      %20 = vsyncadd [#allocation3], %s19
      %p21 = scmp.ne.s32.totalorder 0, %s17
      %s22 = smul.addr %s15, 8
      %s23 = scalar_lea.hbm %s0, %s22
      %s24 = smul.u32 8, %s16
      %s25 = sshll.u32 %s23, 4
      %s26 = int_to_ptr.hbm [resolvable:$true] %s25
      %s27 = sshll.u32 [#allocation2], 4
      %s28 = int_to_ptr.vmem [resolvable:$true] %s27
      %s29 = sshll.u32 %s24, 4
      %33 = dma.hbm_to_vmem [thread:$0]  (%p21), %s26, %s29, %s28, [#allocation3], 128, 128, 8
    $region5: #{tpu_custom_call.1} parent=1 // pred_fallthru
      _
    // Predicated region
    $region6: #{tpu_custom_call.1} parent=1 // pred_check
      _
    $region7: #{tpu_custom_call.1} parent=1 // pred_check_branch
      %35 = sbr.rel (0) target = $region9
    $region8: #{tpu_custom_call.1} parent=1 // pred_region
      %s36 = sadd.s32 0, 0
      %p37 = scmp.lt.s32.totalorder %s36, 0
      %s38 = scalar_select %p37, %s36, 0
      %s39 = smul.u32 8, %s38
      %s40 = ssub.s32 2, %s39
      %s41 = smul.u32 8, %s40
      %s42 = ssub.s32 64, %s41
      %s43 = sshll.u32 %s42, 4
      %44 = vsyncadd [#allocation6], %s43
      %p45 = scmp.ne.s32.totalorder 0, %s41
      %s46 = smul.addr %s39, 8
      %s47 = scalar_lea.hbm %s1, %s46
      %s48 = smul.u32 8, %s40
      %s49 = sshll.u32 %s47, 4
      %s50 = int_to_ptr.hbm [resolvable:$true] %s49
      %s51 = sshll.u32 [#allocation5], 4
      %s52 = int_to_ptr.vmem [resolvable:$true] %s51
      %s53 = sshll.u32 %s48, 4
      %57 = dma.hbm_to_vmem [thread:$0]  (%p45), %s50, %s53, %s52, [#allocation6], 128, 128, 8
    $region9: #{tpu_custom_call.1} parent=1 // pred_fallthru
      _
    // Predicated region
    $region10: #{tpu_custom_call.1} parent=1 // pred_check
      _
    $region11: #{tpu_custom_call.1} parent=1 // pred_check_branch
      %59 = sbr.rel (0) target = $region13
    $region12: #{tpu_custom_call.1} parent=1 // pred_region
      %61 = dma.done [#allocation3], 1024
    $region13: #{tpu_custom_call.1} parent=1 // pred_fallthru
      _
    // Predicated region
    $region14: #{tpu_custom_call.1} parent=1 // pred_check
      _
    $region15: #{tpu_custom_call.1} parent=1 // pred_check_branch
      %63 = sbr.rel (0) target = $region17
    $region16: #{tpu_custom_call.1} parent=1 // pred_region
      %65 = dma.done [#allocation6], 1024
    $region17: #{tpu_custom_call.1} parent=1 // pred_fallthru
      _
    %s66 = sadd.s32 0, 0
    %p67 = scmp.lt.s32.totalorder %s66, 0
    %s68 = scalar_select %p67, %s66, 0
    %s69 = smul.u32 8, %s68
    %s70 = ssub.s32 2, %s69
    %s71 = smul.u32 8, %s70
    %s72 = sadd.s32 0, 0
    %p73 = scmp.lt.s32.totalorder %s72, 0
    %s74 = scalar_select %p73, %s72, 0
    %s75 = smul.u32 8, %s74
    %s76 = ssub.s32 2, %s75
    %s77 = smul.u32 8, %s76
    %p78 = scmp.eq.s32.totalorder 0, 0
    // Predicated region
    $region18: #{tpu_custom_call.1} parent=1 // pred_check
      %p79 = pneg %p78
    $region19: #{tpu_custom_call.1} parent=1 // pred_check_branch
      %81 = sbr.rel (%p79) target = $region21
    $region20: #{tpu_custom_call.1} parent=1 // pred_region
      %82 = vst [vmem:[#allocation7] sm:$0xff] 0.0
    $region21: #{tpu_custom_call.1} parent=1 // pred_fallthru
      _
    %s83 = sadd.s32 0, 0
    %p84 = scmp.lt.s32.totalorder %s83, 0
    // Predicated region
    $region22: #{tpu_custom_call.1} parent=1 // pred_check
      %p85 = pneg %p84
    $region23: #{tpu_custom_call.1} parent=1 // pred_check_branch
      %87 = sbr.rel (%p85) target = $region25
    $region24: #{tpu_custom_call.1} parent=1 // pred_region
      %v88 = vld [vmem:[#allocation7] sm:$0xff]
      %v89 = vld [vmem:[#allocation2] sm:$0xff]
      %v90 = vld [vmem:[#allocation2 + $0x8] sm:$0xff]
      %v91 = vld [vmem:[#allocation2 + $0x10] sm:$0xff]
      %v92 = vld [vmem:[#allocation2 + $0x18] sm:$0xff]
      %v93 = vld [vmem:[#allocation2 + $0x20] sm:$0xff]
      %v94 = vld [vmem:[#allocation2 + $0x28] sm:$0xff]
      %v95 = vld [vmem:[#allocation2 + $0x30] sm:$0xff]
      %v96 = vld [vmem:[#allocation2 + $0x38] sm:$0xff]
      %v97 = vld [vmem:[#allocation5] sm:$0xff]
      %v98 = vld [vmem:[#allocation5 + $0x8] sm:$0xff]
      %v99 = vld [vmem:[#allocation5 + $0x10] sm:$0xff]
      %v100 = vld [vmem:[#allocation5 + $0x18] sm:$0xff]
      %v101 = vld [vmem:[#allocation5 + $0x20] sm:$0xff]
      %v102 = vld [vmem:[#allocation5 + $0x28] sm:$0xff]
      %v103 = vld [vmem:[#allocation5 + $0x30] sm:$0xff]
      %v104 = vld [vmem:[#allocation5 + $0x38] sm:$0xff]
      %v105 = vsub.f32 %v89, %v97
      %v106 = vsub.f32 %v90, %v98
      %v107 = vsub.f32 %v91, %v99
      %v108 = vsub.f32 %v92, %v100
      %v109 = vsub.f32 %v93, %v101
      %v110 = vsub.f32 %v94, %v102
      %v111 = vsub.f32 %v95, %v103
      %v112 = vsub.f32 %v96, %v104
      %v113 = vmul.f32 %v105, %v105
      %v114 = vmul.f32 %v106, %v106
      %v115 = vmul.f32 %v107, %v107
      %v116 = vmul.f32 %v108, %v108
      %v117 = vmul.f32 %v109, %v109
      %v118 = vmul.f32 %v110, %v110
      %v119 = vmul.f32 %v111, %v111
      %v120 = vmul.f32 %v112, %v112
      %v121 = vadd.f32 %v113, %v114
      %v122 = vadd.f32 %v121, %v115
      %v123 = vadd.f32 %v122, %v116
      %v124 = vadd.f32 %v123, %v117
      %v125 = vadd.f32 %v124, %v118
      %v126 = vadd.f32 %v125, %v119
      %v127 = vadd.f32 %v126, %v120
      %v128 = vadd.f32 %v127, 0.0
      %v129 = vadd.f32 %v88, %v128
      %130 = vst [vmem:[#allocation7] sm:$0xff] %v129
    $region25: #{tpu_custom_call.1} parent=1 // pred_fallthru
      _
    %p131 = scmp.ge.s32.totalorder %s83, 0
    // Predicated region
    $region26: #{tpu_custom_call.1} parent=1 // pred_check
      %p132 = pneg %p131
    $region27: #{tpu_custom_call.1} parent=1 // pred_check_branch
      %134 = sbr.rel (%p132) target = $region29
    $region28: #{tpu_custom_call.1} parent=1 // pred_region
      %v135 = vld [vmem:[#allocation7] sm:$0xff]
      %v136 = vld [vmem:[#allocation2] sm:$0xff]
      %v137 = vld [vmem:[#allocation2 + $0x8] sm:$0xff]
      %v138 = vld [vmem:[#allocation2 + $0x10] sm:$0xff]
      %v139 = vld [vmem:[#allocation2 + $0x18] sm:$0xff]
      %v140 = vld [vmem:[#allocation2 + $0x20] sm:$0xff]
      %v141 = vld [vmem:[#allocation2 + $0x28] sm:$0xff]
      %v142 = vld [vmem:[#allocation2 + $0x30] sm:$0xff]
      %v143 = vld [vmem:[#allocation2 + $0x38] sm:$0xff]
      %v144 = vld [vmem:[#allocation5] sm:$0xff]
      %v145 = vld [vmem:[#allocation5 + $0x8] sm:$0xff]
      %v146 = vld [vmem:[#allocation5 + $0x10] sm:$0xff]
      %v147 = vld [vmem:[#allocation5 + $0x18] sm:$0xff]
      %v148 = vld [vmem:[#allocation5 + $0x20] sm:$0xff]
      %v149 = vld [vmem:[#allocation5 + $0x28] sm:$0xff]
      %v150 = vld [vmem:[#allocation5 + $0x30] sm:$0xff]
      %v151 = vld [vmem:[#allocation5 + $0x38] sm:$0xff]
      %v152 = vsub.f32 %v136, %v144
      %v153 = vsub.f32 %v137, %v145
      %v154 = vsub.f32 %v138, %v146
      %v155 = vsub.f32 %v139, %v147
      %v156 = vsub.f32 %v140, %v148
      %v157 = vsub.f32 %v141, %v149
      %v158 = vsub.f32 %v142, %v150
      %v159 = vsub.f32 %v143, %v151
      %v160 = vmul.f32 %v152, %v152
      %v161 = vmul.f32 %v153, %v153
      %v162 = vmul.f32 %v154, %v154
      %v163 = vmul.f32 %v155, %v155
      %v164 = vmul.f32 %v156, %v156
      %v165 = vmul.f32 %v157, %v157
      %v166 = vmul.f32 %v158, %v158
      %v167 = vmul.f32 %v159, %v159
      %s168 = smul.u32 %s83, 64
      %s169 = sadd.s32 %s168, 0
      %v170 = vlaneseq
      %v171 = vshrl.u32 %v170, 7
      %v172 = vadd.s32 %v171, 8
      %v173 = vadd.s32 %v171, 16
      %v174 = vadd.s32 %v171, 24
      %v175 = vadd.s32 %v171, 32
      %v176 = vadd.s32 %v171, 40
      %v177 = vadd.s32 %v171, 48
      %v178 = vadd.s32 %v171, 56
      %v179 = vstv %s169
      %v180 = vadd.s32 %v179, %v171
      %v181 = vadd.s32 %v179, %v172
      %v182 = vadd.s32 %v179, %v173
      %v183 = vadd.s32 %v179, %v174
      %v184 = vadd.s32 %v179, %v175
      %v185 = vadd.s32 %v179, %v176
      %v186 = vadd.s32 %v179, %v177
      %v187 = vadd.s32 %v179, %v178
      %vm188 = vcmp.lt.s32.totalorder %v180, 16
      %vm189 = vcmp.lt.s32.totalorder %v181, 16
      %vm190 = vcmp.lt.s32.totalorder %v182, 16
      %vm191 = vcmp.lt.s32.totalorder %v183, 16
      %vm192 = vcmp.lt.s32.totalorder %v184, 16
      %vm193 = vcmp.lt.s32.totalorder %v185, 16
      %vm194 = vcmp.lt.s32.totalorder %v186, 16
      %vm195 = vcmp.lt.s32.totalorder %v187, 16
      %v196 = vsel %vm188, %v160, 0.0
      %v197 = vsel %vm189, %v161, 0.0
      %v198 = vsel %vm190, %v162, 0.0
      %v199 = vsel %vm191, %v163, 0.0
      %v200 = vsel %vm192, %v164, 0.0
      %v201 = vsel %vm193, %v165, 0.0
      %v202 = vsel %vm194, %v166, 0.0
      %v203 = vsel %vm195, %v167, 0.0
      %v204 = vadd.f32 %v196, %v197
      %v205 = vadd.f32 %v204, %v198
      %v206 = vadd.f32 %v205, %v199
      %v207 = vadd.f32 %v206, %v200
      %v208 = vadd.f32 %v207, %v201
      %v209 = vadd.f32 %v208, %v202
      %v210 = vadd.f32 %v209, %v203
      %v211 = vadd.f32 %v210, 0.0
      %v212 = vadd.f32 %v135, %v211
      %213 = vst [vmem:[#allocation7] sm:$0xff] %v212
    $region29: #{tpu_custom_call.1} parent=1 // pred_fallthru
      _
    // Predicated region
    $region30: #{tpu_custom_call.1} parent=1 // pred_check
      _
    $region31: #{tpu_custom_call.1} parent=1 // pred_check_branch
      %215 = sbr.rel (0) target = $region33
    $region32: #{tpu_custom_call.1} parent=1 // pred_region
      %217 = vsyncadd [#allocation4], 0
      %s219 = sshll.u32 [#allocation7], 4
      %s220 = int_to_ptr.vmem [resolvable:$true] %s219
      %s221 = sshll.u32 %s2, 4
      %s222 = int_to_ptr.hbm [resolvable:$true] %s221
      %224 = dma.vmem_to_hbm [thread:$0]  %s220, 128, %s222, [#allocation4]
    $region33: #{tpu_custom_call.1} parent=1 // pred_fallthru
      _
    // Predicated region
    $region34: #{tpu_custom_call.1} parent=1 // pred_check
      _
    $region35: #{tpu_custom_call.1} parent=1 // pred_check_branch
      %226 = sbr.rel (0) target = $region37
    $region36: #{tpu_custom_call.1} parent=1 // pred_region
      %228 = dma.done [#allocation4], 128
    $region37: #{tpu_custom_call.1} parent=1 // pred_fallthru
      _
    %229 = vsyncpa [#allocation3], 1
    %230 = vsyncpa [#allocation6], 1
    %231 = vsyncpa [#allocation4], 1

</llo_original>
